<compile_context>
chip_gen: v7x
topology: tpu7x:2x2x1
jax: 0.10.0
libtpu: 0.0.40
codegen_flags: <defaults>
</compile_context>

<pallas_src>
import inspect
import math

import jax
import jax.numpy as jnp
from jax.experimental import pallas as pl
from jax.experimental.pallas import tpu as pltpu


# TODO(synk): the encoder `f` is a constructor-injected module (arbitrary
# architecture); it is modeled here as the identity on pre-computed features.
def encoder_f(x):
    return x


def _round_up(n, m):
    return ((n + m - 1) // m) * m


def _pad2(a, rows, cols):
    pr, pc = rows - a.shape[0], cols - a.shape[1]
    if pr or pc:
        a = jnp.pad(a, ((0, pr), (0, pc)))
    return a


def _weights_single_buffered():
    """Deterministic feature check for BlockSpec(pipeline_mode=pl.Buffered(1))."""
    if not hasattr(pl, "Buffered"):
        return False
    try:
        return "pipeline_mode" in inspect.signature(pl.BlockSpec).parameters
    except (TypeError, ValueError):
        return False


def _vmem_cap_bytes():
    """~85% of per-core VMEM (leaves headroom for Mosaic internal scratch)."""
    try:
        return int(pltpu.get_tpu_info().vmem_capacity_bytes * 0.85)
    except Exception:
        return 48 << 20  # conservative fallback: safe even on v7x (64 MiB/TC)


# ---------------------------------------------------------------------------
# Kernels
# ---------------------------------------------------------------------------

def _mlp_tile(x_ref, w1_ref, b1_ref, w2_ref, b2_ref, w3_ref, b3_ref, o_ref,
              m1_ref=None, m2_ref=None):
    """One (blk, E_p) batch tile through the 3-layer MLP.

    Matmuls run on the MXU in the weights' dtype (bf16) with f32 accumulation;
    bias adds stay f32 on the VPU. Dropout is a 0/1 keep-mask multiply (the
    1/(1-p) rescale is pre-folded into w2/w3 by the wrapper).
    """
    cdt = w1_ref.dtype

    h1 = jnp.dot(x_ref[...], w1_ref[...],
                 preferred_element_type=jnp.float32) + b1_ref[...]
    h1 = h1.astype(cdt)
    if m1_ref is not None:
        h1 = h1 * m1_ref[...]

    h2 = jnp.dot(h1, w2_ref[...],
                 preferred_element_type=jnp.float32) + b2_ref[...]
    h2 = h2.astype(cdt)
    if m2_ref is not None:
        h2 = h2 * m2_ref[...]

    out = jnp.dot(h2, w3_ref[...],
                  preferred_element_type=jnp.float32) + b3_ref[...]
    o_ref[...] = out.astype(o_ref.dtype)


def _kernel_eval(x_ref, w1_ref, b1_ref, w2_ref, b2_ref, w3_ref, b3_ref, o_ref):
    _mlp_tile(x_ref, w1_ref, b1_ref, w2_ref, b2_ref, w3_ref, b3_ref, o_ref)


def _kernel_train(x_ref, m1_ref, m2_ref, w1_ref, b1_ref, w2_ref, b2_ref,
                  w3_ref, b3_ref, o_ref):
    _mlp_tile(x_ref, w1_ref, b1_ref, w2_ref, b2_ref, w3_ref, b3_ref, o_ref,
              m1_ref=m1_ref, m2_ref=m2_ref)


# ---------------------------------------------------------------------------
# Wrapper
# ---------------------------------------------------------------------------

def projection_head_forward(x, params, *, dropout_p=0.25, training=False,
                            rng_key=None, block_b=512,
                            compute_dtype=jnp.bfloat16,
                            out_dtype=jnp.float32):
    """x: (B, emb_size) f32 features (output of encoder f). Returns (B, latent).

    Pass out_dtype=jnp.bfloat16 to halve the output writeback if the downstream
    contrastive loss tolerates it.
    """
    assert 0.0 <= dropout_p < 1.0
    B, E = x.shape
    L = params["w3"].shape[1]

    # Lane-dense padding: feature/latent dims -> multiples of 128 (zero-padding
    # is exact for Linear layers). Batch is padded only to a multiple of 16
    # (bf16 sublane packing); the grid masks the partial last tile instead of
    # padding the batch to a full tile multiple.
    E_p = _round_up(E, 128)
    L_p = _round_up(L, 128)
    B_p = _round_up(max(B, 1), 16)

    # Batch tile: <= 512, multiple of 16, and split so the grid has >= 2 tiles
    # whenever the batch allows (lets v7x shard the parallel axis across 2 TCs).
    blk = max(16, _round_up(min(block_b, B_p), 16))
    if B_p > 16 and pl.cdiv(B_p, blk) < 2:
        blk = max(16, _round_up(pl.cdiv(B_p, 2), 16))
    n_tiles = pl.cdiv(B_p, blk)

    training_active = bool(training) and dropout_p > 0.0
    # Fold the inverted-dropout 1/(1-p) rescale into the *next* layer's weights
    # (bias unaffected): the in-kernel mask is then a pure 0/1 keep multiply.
    scale = (1.0 / (1.0 - dropout_p)) if training_active else 1.0

    w1 = _pad2(params["w1"], E_p, E_p).astype(compute_dtype)
    w2 = _pad2(params["w2"] * scale, E_p, E_p).astype(compute_dtype)
    w3 = _pad2(params["w3"] * scale, E_p, L_p).astype(compute_dtype)
    b1 = _pad2(params["b1"], 1, E_p)          # biases stay f32
    b2 = _pad2(params["b2"], 1, E_p)
    b3 = _pad2(params["b3"], 1, L_p)
    x_p = _pad2(x, B_p, E_p).astype(compute_dtype)

    # Deterministic single-buffer decision for the constant-index weights.
    single_w = _weights_single_buffered()
    wkw = {"pipeline_mode": pl.Buffered(1)} if single_w else {}
    w_mult = 1 if single_w else 2

    # VMEM budget sized for the path actually compiled.
    c_sz = jnp.dtype(compute_dtype).itemsize
    o_sz = jnp.dtype(out_dtype).itemsize
    w_bytes = (2 * E_p * E_p + E_p * L_p) * c_sz + (2 * E_p + L_p) * 4
    n_streamed = 1 + (2 if training_active else 0)        # x (+ 2 dropout masks)
    t_bytes = 2 * blk * E_p * c_sz * n_streamed + 2 * blk * L_p * o_sz
    vmem_limit = w_mult * w_bytes + t_bytes + (4 << 20)
    vmem_limit = int(min(max(vmem_limit, 16 << 20), _vmem_cap_bytes()))

    x_map = lambda i: (i, 0)
    w_map = lambda i: (0, 0)
    x_spec = pl.BlockSpec((blk, E_p), x_map)

    in_specs = [x_spec]
    args = [x_p]
    if training_active:
        if rng_key is None:
            rng_key = jax.random.PRNGKey(0)
        k1, k2 = jax.random.split(rng_key)
        keep = 1.0 - dropout_p
        m1 = jax.random.bernoulli(k1, keep, (B_p, E_p)).astype(compute_dtype)
        m2 = jax.random.bernoulli(k2, keep, (B_p, E_p)).astype(compute_dtype)
        in_specs += [x_spec, x_spec]
        args += [m1, m2]
        kernel = _kernel_train
    else:
        kernel = _kernel_eval

    in_specs += [
        pl.BlockSpec((E_p, E_p), w_map, **wkw),   # w1 (resident)
        pl.BlockSpec((1, E_p), w_map, **wkw),     # b1
        pl.BlockSpec((E_p, E_p), w_map, **wkw),   # w2
        pl.BlockSpec((1, E_p), w_map, **wkw),     # b2
        pl.BlockSpec((E_p, L_p), w_map, **wkw),   # w3
        pl.BlockSpec((1, L_p), w_map, **wkw),     # b3
    ]
    args += [w1, b1, w2, b2, w3, b3]

    out_p = pl.pallas_call(
        kernel,
        out_shape=jax.ShapeDtypeStruct((B_p, L_p), out_dtype),
        grid_spec=pltpu.PrefetchScalarGridSpec(
            num_scalar_prefetch=0,
            grid=(n_tiles,),
            in_specs=in_specs,
            out_specs=pl.BlockSpec((blk, L_p), x_map)),
        compiler_params=pltpu.CompilerParams(
            # Batch axis carries no accumulator -> shardable across v7x TCs.
            dimension_semantics=("parallel",),
            vmem_limit_bytes=vmem_limit),
    )(*args)

    return out_p[:B, :L]


# ---------------------------------------------------------------------------
# Params / reference
# ---------------------------------------------------------------------------

def init_projection_head_params(key, emb_size, latent_size):
    """Deterministic init matching nn.Linear defaults (U[-1/sqrt(in), 1/sqrt(in)]).
    Weights stored transposed as (in, out); biases as (1, out)."""
    ks = jax.random.split(key, 6)

    def linear(kw, kb, fan_in, fan_out):
        bound = 1.0 / math.sqrt(fan_in)
        w = jax.random.uniform(kw, (fan_in, fan_out), jnp.float32, -bound, bound)
        b = jax.random.uniform(kb, (1, fan_out), jnp.float32, -bound, bound)
        return w, b

    w1, b1 = linear(ks[0], ks[1], emb_size, emb_size)
    w2, b2 = linear(ks[2], ks[3], emb_size, emb_size)
    w3, b3 = linear(ks[4], ks[5], emb_size, latent_size)
    return dict(w1=w1, b1=b1, w2=w2, b2=b2, w3=w3, b3=b3)


def reference_forward(x, params, compute_dtype=jnp.bfloat16):
    """Pure-JAX reference (eval mode: dropout is identity) using the same
    bf16-operand / f32-accumulate matmul contract as the kernel."""
    c = compute_dtype
    h = encoder_f(x)
    h = jnp.dot(h.astype(c), params["w1"].astype(c),
                preferred_element_type=jnp.float32) + params["b1"]
    h = jnp.dot(h.astype(c), params["w2"].astype(c),
                preferred_element_type=jnp.float32) + params["b2"]
    return jnp.dot(h.astype(c), params["w3"].astype(c),
                   preferred_element_type=jnp.float32) + params["b3"]


if __name__ == "__main__":
    batch, emb_size, latent_size = 8, 32, 16

    key = jax.random.PRNGKey(0)
    k_x, k_p, k_d = jax.random.split(key, 3)
    x = jax.random.normal(k_x, (batch, emb_size), dtype=jnp.float32)
    params = init_projection_head_params(k_p, emb_size, latent_size)

    # forward: features = f(x); latent = g(features)
    features = encoder_f(x)

    # Eval mode (Dropout == identity): must match the pure-JAX reference.
    latent = projection_head_forward(features, params, dropout_p=0.25,
                                     training=False)
    latent = jax.block_until_ready(latent)
    ref = reference_forward(x, params)
    assert latent.shape == (batch, latent_size)
    assert jnp.allclose(latent, ref, atol=1e-3, rtol=1e-3), \
        float(jnp.max(jnp.abs(latent - ref)))

    # Training mode: exercises the fused inverted-dropout path (streamed masks).
    latent_tr = projection_head_forward(features, params, dropout_p=0.25,
                                        training=True, rng_key=k_d)
    latent_tr = jax.block_until_ready(latent_tr)
    assert latent_tr.shape == (batch, latent_size)
    assert bool(jnp.all(jnp.isfinite(latent_tr)))

    print("KERNEL_OK")
</pallas_src>

<mosaic_0001>
module attributes {stable_mosaic.version = 11 : i64} {
  func.func @_kernel_eval(%arg0: i32, %arg1: memref<16x128xbf16, #tpu.memory_space<vmem>>, %arg2: memref<128x128xbf16, #tpu.memory_space<vmem>>, %arg3: memref<1x128xf32, #tpu.memory_space<vmem>>, %arg4: memref<128x128xbf16, #tpu.memory_space<vmem>>, %arg5: memref<1x128xf32, #tpu.memory_space<vmem>>, %arg6: memref<128x128xbf16, #tpu.memory_space<vmem>>, %arg7: memref<1x128xf32, #tpu.memory_space<vmem>>, %arg8: memref<16x128xf32, #tpu.memory_space<vmem>>) attributes {dimension_semantics = [#tpu.dimension_semantics<parallel>], iteration_bounds = array<i64: 1>, scalar_prefetch = 0 : i64, scratch_operands = 0 : i64, tpu.core_type = #tpu.core_type<tc>, window_params = [{transform_indices = @transform_0, window_bounds = array<i64: 16, 128>}, {pipeline_mode = #tpu.pipeline_mode<synchronous>, transform_indices = @transform_1, window_bounds = array<i64: 128, 128>}, {pipeline_mode = #tpu.pipeline_mode<synchronous>, transform_indices = @transform_2, window_bounds = array<i64: 1, 128>}, {pipeline_mode = #tpu.pipeline_mode<synchronous>, transform_indices = @transform_3, window_bounds = array<i64: 128, 128>}, {pipeline_mode = #tpu.pipeline_mode<synchronous>, transform_indices = @transform_4, window_bounds = array<i64: 1, 128>}, {pipeline_mode = #tpu.pipeline_mode<synchronous>, transform_indices = @transform_5, window_bounds = array<i64: 128, 128>}, {pipeline_mode = #tpu.pipeline_mode<synchronous>, transform_indices = @transform_6, window_bounds = array<i64: 1, 128>}, {transform_indices = @transform_7, window_bounds = array<i64: 16, 128>}]} {
    %c0 = arith.constant 0 : index
    %c0_0 = arith.constant 0 : index
    %0 = vector.load %arg1[%c0, %c0_0] : memref<16x128xbf16, #tpu.memory_space<vmem>>, vector<16x128xbf16>
    %c0_1 = arith.constant 0 : index
    %c0_2 = arith.constant 0 : index
    %1 = vector.load %arg2[%c0_1, %c0_2] : memref<128x128xbf16, #tpu.memory_space<vmem>>, vector<128x128xbf16>
    %cst = arith.constant dense<0.000000e+00> : vector<16x128xf32>
    %2 = tpu.matmul %0, %1, %cst {dimension_numbers = #tpu.dot_dimension_numbers<[1], [0], [0], [1], [0, 0, 1, 1], [], []>} : vector<16x128xbf16>, vector<128x128xbf16>, vector<16x128xf32> -> vector<16x128xf32>
    %c0_3 = arith.constant 0 : index
    %c0_4 = arith.constant 0 : index
    %3 = vector.load %arg3[%c0_3, %c0_4] : memref<1x128xf32, #tpu.memory_space<vmem>>, vector<1x128xf32>
    %4 = vector.broadcast %3 : vector<1x128xf32> to vector<16x128xf32>
    %5 = arith.addf %2, %4 : vector<16x128xf32>
    %6 = arith.truncf %5 : vector<16x128xf32> to vector<16x128xbf16>
    %c0_5 = arith.constant 0 : index
    %c0_6 = arith.constant 0 : index
    %7 = vector.load %arg4[%c0_5, %c0_6] : memref<128x128xbf16, #tpu.memory_space<vmem>>, vector<128x128xbf16>
    %cst_7 = arith.constant dense<0.000000e+00> : vector<16x128xf32>
    %8 = tpu.matmul %6, %7, %cst_7 {dimension_numbers = #tpu.dot_dimension_numbers<[1], [0], [0], [1], [0, 0, 1, 1], [], []>} : vector<16x128xbf16>, vector<128x128xbf16>, vector<16x128xf32> -> vector<16x128xf32>
    %c0_8 = arith.constant 0 : index
    %c0_9 = arith.constant 0 : index
    %9 = vector.load %arg5[%c0_8, %c0_9] : memref<1x128xf32, #tpu.memory_space<vmem>>, vector<1x128xf32>
    %10 = vector.broadcast %9 : vector<1x128xf32> to vector<16x128xf32>
    %11 = arith.addf %8, %10 : vector<16x128xf32>
    %12 = arith.truncf %11 : vector<16x128xf32> to vector<16x128xbf16>
    %c0_10 = arith.constant 0 : index
    %c0_11 = arith.constant 0 : index
    %13 = vector.load %arg6[%c0_10, %c0_11] : memref<128x128xbf16, #tpu.memory_space<vmem>>, vector<128x128xbf16>
    %cst_12 = arith.constant dense<0.000000e+00> : vector<16x128xf32>
    %14 = tpu.matmul %12, %13, %cst_12 {dimension_numbers = #tpu.dot_dimension_numbers<[1], [0], [0], [1], [0, 0, 1, 1], [], []>} : vector<16x128xbf16>, vector<128x128xbf16>, vector<16x128xf32> -> vector<16x128xf32>
    %c0_13 = arith.constant 0 : index
    %c0_14 = arith.constant 0 : index
    %15 = vector.load %arg7[%c0_13, %c0_14] : memref<1x128xf32, #tpu.memory_space<vmem>>, vector<1x128xf32>
    %16 = vector.broadcast %15 : vector<1x128xf32> to vector<16x128xf32>
    %17 = arith.addf %14, %16 : vector<16x128xf32>
    %c0_15 = arith.constant 0 : index
    %c0_16 = arith.constant 0 : index
    %18 = vector.load %arg8[%c0_15, %c0_16] : memref<16x128xf32, #tpu.memory_space<vmem>>, vector<16x128xf32>
    tpu.vector_store %arg8[%c0_15, %c0_16], %17 {strides = array<i32>} : memref<16x128xf32, #tpu.memory_space<vmem>>, vector<16x128xf32>,
    return
  }
  func.func @transform_0(%arg0: i32) -> (i32, i32) {
    %c0_i32 = arith.constant 0 : i32
    %c0_i32_0 = arith.constant 0 : i32
    return %arg0, %c0_i32 : i32, i32
  }
  func.func @transform_1(%arg0: i32) -> (i32, i32) {
    %c0_i32 = arith.constant 0 : i32
    %c0_i32_0 = arith.constant 0 : i32
    %c0_i32_1 = arith.constant 0 : i32
    return %c0_i32, %c0_i32_0 : i32, i32
  }
  func.func @transform_2(%arg0: i32) -> (i32, i32) {
    %c0_i32 = arith.constant 0 : i32
    %c0_i32_0 = arith.constant 0 : i32
    %c0_i32_1 = arith.constant 0 : i32
    return %c0_i32, %c0_i32_0 : i32, i32
  }
  func.func @transform_3(%arg0: i32) -> (i32, i32) {
    %c0_i32 = arith.constant 0 : i32
    %c0_i32_0 = arith.constant 0 : i32
    %c0_i32_1 = arith.constant 0 : i32
    return %c0_i32, %c0_i32_0 : i32, i32
  }
  func.func @transform_4(%arg0: i32) -> (i32, i32) {
    %c0_i32 = arith.constant 0 : i32
    %c0_i32_0 = arith.constant 0 : i32
    %c0_i32_1 = arith.constant 0 : i32
    return %c0_i32, %c0_i32_0 : i32, i32
  }
  func.func @transform_5(%arg0: i32) -> (i32, i32) {
    %c0_i32 = arith.constant 0 : i32
    %c0_i32_0 = arith.constant 0 : i32
    %c0_i32_1 = arith.constant 0 : i32
    return %c0_i32, %c0_i32_0 : i32, i32
  }
  func.func @transform_6(%arg0: i32) -> (i32, i32) {
    %c0_i32 = arith.constant 0 : i32
    %c0_i32_0 = arith.constant 0 : i32
    %c0_i32_1 = arith.constant 0 : i32
    return %c0_i32, %c0_i32_0 : i32, i32
  }
  func.func @transform_7(%arg0: i32) -> (i32, i32) {
    %c0_i32 = arith.constant 0 : i32
    %c0_i32_0 = arith.constant 0 : i32
    return %arg0, %c0_i32 : i32, i32
  }
}

</mosaic_0001>

<llo_original>
// kernel: tpu_custom_call.1
$region0: #{tpu_custom_call.1}
  #allocation0 [shape = 'u32[]', space=smem, size = 0x4, offset = 0x4, fixed_abs, tag = 'smem constant byte address 0x4 - core index']
  #allocation1 [shape = 'u32[144,128]{1,0:T(1,128)}', space=vmem, size = 0x12000, scoped, tag = 'internal scratch']
  %s0 = inlined_call_operand.hbm [shape: bf16[16,128], index: 0, kind: input, shape index: {}]
  %s1 = inlined_call_operand.hbm [shape: bf16[128,128], index: 1, kind: input, shape index: {}]
  %s2 = inlined_call_operand.vmem [shape: f32[1,128], index: 2, kind: input, shape index: {}]
  %s3 = inlined_call_operand.hbm [shape: bf16[128,128], index: 3, kind: input, shape index: {}]
  %s4 = inlined_call_operand.vmem [shape: f32[1,128], index: 4, kind: input, shape index: {}]
  %s5 = inlined_call_operand.hbm [shape: bf16[128,128], index: 5, kind: input, shape index: {}]
  %s6 = inlined_call_operand.vmem [shape: f32[1,128], index: 6, kind: input, shape index: {}]
  %s7 = inlined_call_operand.hbm [shape: f32[16,128], index: 7, kind: output, shape index: {}]
  %s8 = sld [smem:[#allocation0]]
  $region54: #{tpu_custom_call.1} parent=0
    _
  %s10 = ssub.s32 1, %s8
  %s11 = scalar_select 0, %s10, %s8
  $region1: #{tpu_custom_call.1} parent=0
    #allocation2 [shape = 'u8[4096]{0}', space=vmem, size = 0x1000, scoped, tag = 'input window, operand 0, single buffered']
    #allocation3 [shape = 's32[1]{0}', space=sflag, size = 0x4, scoped, tag = 'scoped memory for tpu_custom_call.1']
    #allocation4 [shape = 's32[1]{0}', space=sflag, size = 0x4, scoped, tag = 'scoped memory for tpu_custom_call.1']
    #allocation5 [shape = 'u8[32768]{0}', space=vmem, size = 0x8000, scoped, tag = 'input window, operand 1, single buffered']
    #allocation6 [shape = 's32[1]{0}', space=sflag, size = 0x4, scoped, tag = 'scoped memory for tpu_custom_call.1']
    #allocation7 [shape = 'u8[32768]{0}', space=vmem, size = 0x8000, scoped, tag = 'input window, operand 3, single buffered']
    #allocation8 [shape = 'u8[32768]{0}', space=vmem, size = 0x8000, scoped, tag = 'input window, operand 5, single buffered']
    #allocation9 [shape = 's32[1]{0}', space=sflag, size = 0x4, scoped, tag = 'scoped memory for tpu_custom_call.1']
    #allocation10 [shape = 'u8[8192]{0}', space=vmem, size = 0x2000, scoped, tag = 'output window, operand 0, single buffered']
    %12 = vsyncpa [#allocation3], 0
    %13 = vsyncpa [#allocation6], 0
    %14 = vsyncpa [#allocation9], 0
    %15 = vsyncpa [#allocation4], 0
    // Predicated region
    $region2: #{tpu_custom_call.1} parent=1 // pred_check
      _
    $region3: #{tpu_custom_call.1} parent=1 // pred_check_branch
      %17 = sbr.rel (0) target = $region5
    $region4: #{tpu_custom_call.1} parent=1 // pred_region
      %s19 = ssub.s32 128, 128
      %20 = vsyncadd [#allocation3], %s19
      %s21 = sshll.u32 [#allocation2], 4
      %s22 = int_to_ptr.vmem [resolvable:$true] %s21
      %27 = dma.hbm_to_vmem [thread:$0]  %s0, 128, %s22, [#allocation3], 64, 64, 4
    $region5: #{tpu_custom_call.1} parent=1 // pred_fallthru
      _
    // Predicated region
    $region6: #{tpu_custom_call.1} parent=1 // pred_check
      _
    $region7: #{tpu_custom_call.1} parent=1 // pred_check_branch
      %29 = sbr.rel (0) target = $region9
    $region8: #{tpu_custom_call.1} parent=1 // pred_region
      %s31 = ssub.s32 1024, 1024
      %32 = vsyncadd [#allocation6], %s31
      %s33 = sshll.u32 [#allocation5], 4
      %s34 = int_to_ptr.vmem [resolvable:$true] %s33
      %39 = dma.hbm_to_vmem [thread:$0]  %s1, 1024, %s34, [#allocation6], 64, 64, 4
    $region9: #{tpu_custom_call.1} parent=1 // pred_fallthru
      _
    // Predicated region
    $region10: #{tpu_custom_call.1} parent=1 // pred_check
      _
    $region11: #{tpu_custom_call.1} parent=1 // pred_check_branch
      %41 = sbr.rel (0) target = $region13
    $region12: #{tpu_custom_call.1} parent=1 // pred_region
      _
    $region13: #{tpu_custom_call.1} parent=1 // pred_fallthru
      _
    // Predicated region
    $region14: #{tpu_custom_call.1} parent=1 // pred_check
      _
    $region15: #{tpu_custom_call.1} parent=1 // pred_check_branch
      %43 = sbr.rel (0) target = $region17
    $region16: #{tpu_custom_call.1} parent=1 // pred_region
      %s45 = ssub.s32 1024, 1024
      %46 = vsyncadd [#allocation6], %s45
      %s47 = sshll.u32 [#allocation7], 4
      %s48 = int_to_ptr.vmem [resolvable:$true] %s47
      %53 = dma.hbm_to_vmem [thread:$0]  %s3, 1024, %s48, [#allocation6], 64, 64, 4
    $region17: #{tpu_custom_call.1} parent=1 // pred_fallthru
      _
    // Predicated region
    $region18: #{tpu_custom_call.1} parent=1 // pred_check
      _
    $region19: #{tpu_custom_call.1} parent=1 // pred_check_branch
      %55 = sbr.rel (0) target = $region21
    $region20: #{tpu_custom_call.1} parent=1 // pred_region
      _
    $region21: #{tpu_custom_call.1} parent=1 // pred_fallthru
      _
    // Predicated region
    $region22: #{tpu_custom_call.1} parent=1 // pred_check
      _
    $region23: #{tpu_custom_call.1} parent=1 // pred_check_branch
      %57 = sbr.rel (0) target = $region25
    $region24: #{tpu_custom_call.1} parent=1 // pred_region
      %s59 = ssub.s32 1024, 1024
      %60 = vsyncadd [#allocation9], %s59
      %s61 = sshll.u32 [#allocation8], 4
      %s62 = int_to_ptr.vmem [resolvable:$true] %s61
      %67 = dma.hbm_to_vmem [thread:$0]  %s5, 1024, %s62, [#allocation9], 64, 64, 4
    $region25: #{tpu_custom_call.1} parent=1 // pred_fallthru
      _
    // Predicated region
    $region26: #{tpu_custom_call.1} parent=1 // pred_check
      _
    $region27: #{tpu_custom_call.1} parent=1 // pred_check_branch
      %69 = sbr.rel (0) target = $region29
    $region28: #{tpu_custom_call.1} parent=1 // pred_region
      _
    $region29: #{tpu_custom_call.1} parent=1 // pred_fallthru
      _
    // Predicated region
    $region30: #{tpu_custom_call.1} parent=1 // pred_check
      _
    $region31: #{tpu_custom_call.1} parent=1 // pred_check_branch
      %71 = sbr.rel (0) target = $region33
    $region32: #{tpu_custom_call.1} parent=1 // pred_region
      %72 = dma.done [#allocation3], 128
    $region33: #{tpu_custom_call.1} parent=1 // pred_fallthru
      _
    // Predicated region
    $region34: #{tpu_custom_call.1} parent=1 // pred_check
      _
    $region35: #{tpu_custom_call.1} parent=1 // pred_check_branch
      %74 = sbr.rel (0) target = $region37
    $region36: #{tpu_custom_call.1} parent=1 // pred_region
      %75 = dma.done [#allocation6], 1024
    $region37: #{tpu_custom_call.1} parent=1 // pred_fallthru
      _
    // Predicated region
    $region38: #{tpu_custom_call.1} parent=1 // pred_check
      _
    $region39: #{tpu_custom_call.1} parent=1 // pred_check_branch
      %77 = sbr.rel (0) target = $region41
    $region40: #{tpu_custom_call.1} parent=1 // pred_region
      %78 = dma.done [#allocation6], 1024
    $region41: #{tpu_custom_call.1} parent=1 // pred_fallthru
      _
    // Predicated region
    $region42: #{tpu_custom_call.1} parent=1 // pred_check
      _
    $region43: #{tpu_custom_call.1} parent=1 // pred_check_branch
      %80 = sbr.rel (0) target = $region45
    $region44: #{tpu_custom_call.1} parent=1 // pred_region
      %81 = dma.done [#allocation9], 1024
    $region45: #{tpu_custom_call.1} parent=1 // pred_fallthru
      _
    %v83 = vld [vmem:[#allocation2] sm:$0xf]
    %v84 = vld [vmem:[#allocation2 + $0x4] sm:$0xf]
    %v85 = vld [vmem:[#allocation5] sm:$0xf]
    %v86 = vld [vmem:[#allocation5 + $0x4] sm:$0xf]
    %v87 = vld [vmem:[#allocation5 + $0x8] sm:$0xf]
    %v88 = vld [vmem:[#allocation5 + $0xc] sm:$0xf]
    %v89 = vld [vmem:[#allocation5 + $0x10] sm:$0xf]
    %v90 = vld [vmem:[#allocation5 + $0x14] sm:$0xf]
    %v91 = vld [vmem:[#allocation5 + $0x18] sm:$0xf]
    %v92 = vld [vmem:[#allocation5 + $0x1c] sm:$0xf]
    %v93 = vld [vmem:[#allocation5 + $0x20] sm:$0xf]
    %v94 = vld [vmem:[#allocation5 + $0x24] sm:$0xf]
    %v95 = vld [vmem:[#allocation5 + $0x28] sm:$0xf]
    %v96 = vld [vmem:[#allocation5 + $0x2c] sm:$0xf]
    %v97 = vld [vmem:[#allocation5 + $0x30] sm:$0xf]
    %v98 = vld [vmem:[#allocation5 + $0x34] sm:$0xf]
    %v99 = vld [vmem:[#allocation5 + $0x38] sm:$0xf]
    %v100 = vld [vmem:[#allocation5 + $0x3c] sm:$0xf]
    %v101 = vld [vmem:[%s2] sm:$0x1]
    %v103 = vlaneseq
    %v104 = vshrl.u32 %v103, 7
    %v105 = vsub.s32 0, %v104
    %v106 = vrot.slane %v101, %v105
    %v110 = vunpack.c.l.b16 %v83
    %v111 = vunpack.c.l.b16 %v84
    %v112 = vpack.c.b16 %v111, %v110
    %v130 = vunpack.c.l.b16 %v85
    %v131 = vunpack.c.l.b16 %v86
    %v132 = vunpack.c.l.b16 %v87
    %v133 = vunpack.c.l.b16 %v88
    %v134 = vunpack.c.l.b16 %v89
    %v135 = vunpack.c.l.b16 %v90
    %v136 = vunpack.c.l.b16 %v91
    %v137 = vunpack.c.l.b16 %v92
    %v138 = vunpack.c.l.b16 %v93
    %v139 = vunpack.c.l.b16 %v94
    %v140 = vunpack.c.l.b16 %v95
    %v141 = vunpack.c.l.b16 %v96
    %v142 = vunpack.c.l.b16 %v97
    %v143 = vunpack.c.l.b16 %v98
    %v144 = vunpack.c.l.b16 %v99
    %v145 = vunpack.c.l.b16 %v100
    %v146 = vpack.c.b16 %v131, %v130
    %v147 = vpack.c.b16 %v133, %v132
    %v148 = vpack.c.b16 %v135, %v134
    %v149 = vpack.c.b16 %v137, %v136
    %v150 = vpack.c.b16 %v139, %v138
    %v151 = vpack.c.b16 %v141, %v140
    %v152 = vpack.c.b16 %v143, %v142
    %v153 = vpack.c.b16 %v145, %v144
    %162 = vmatprep.subr.bf16.mxu0 0
    %163 = vmatpush1.bf16.msra.mxu0 %v146
    %164 = vmatprep.subr.bf16.mxu0 0
    %165 = vmatpush1.bf16.msra.mxu0 %v147
    %166 = vmatprep.subr.bf16.mxu0 0
    %167 = vmatpush1.bf16.msra.mxu0 %v148
    %168 = vmatprep.subr.bf16.mxu0 0
    %169 = vmatpush1.bf16.msra.mxu0 %v149
    %170 = vmatprep.subr.bf16.mxu0 0
    %171 = vmatpush1.bf16.msra.mxu0 %v150
    %172 = vmatprep.subr.bf16.mxu0 0
    %173 = vmatpush1.bf16.msra.mxu0 %v151
    %174 = vmatprep.subr.bf16.mxu0 0
    %175 = vmatpush1.bf16.msra.mxu0 %v152
    %176 = vmatprep.subr.bf16.mxu0 0
    %177 = vmatpush1.bf16.msra.mxu0 %v153
    %178 = vmatprep.subr.bf16.mxu0 0
    %179 = vmatpush1.bf16.msra.mxu0 0
    %180 = vmatprep.subr.bf16.mxu0 0
    %181 = vmatpush1.bf16.msra.mxu0 0
    %182 = vmatprep.subr.bf16.mxu0 0
    %183 = vmatpush1.bf16.msra.mxu0 0
    %184 = vmatprep.subr.bf16.mxu0 0
    %185 = vmatpush1.bf16.msra.mxu0 0
    %186 = vmatprep.subr.bf16.mxu0 0
    %187 = vmatpush1.bf16.msra.mxu0 0
    %188 = vmatprep.subr.bf16.mxu0 0
    %189 = vmatpush1.bf16.msra.mxu0 0
    %190 = vmatprep.subr.bf16.mxu0 0
    %191 = vmatpush1.bf16.msra.mxu0 0
    %192 = vmatprep.subr.bf16.mxu0 0
    %193 = vmatpush1.bf16.msra.mxu0 0
    %194 = vmatprep.mubr.bf16.mxu0 0
    %195 = vmatmul.mubr.bf16.gmra.mrb[0].mxu0 %v112
    %v196 = vpop.f32.mrb[0].mxu0
    %v197 = vadd.f32 %v106, %v196
    %v198 = vpop.f32.mrb[0].mxu0
    %v199 = vpop.f32.mrb[0].mxu0
    %v200 = vadd.f32 %v106, %v199
    %v201 = vpop.f32.mrb[0].mxu0
    %202 = vdwg.mxu0
    %v203 = vpack.c.bf16 %v200, %v197
    %v204 = vld [vmem:[#allocation7] sm:$0xf]
    %v205 = vld [vmem:[#allocation7 + $0x4] sm:$0xf]
    %v206 = vld [vmem:[#allocation7 + $0x8] sm:$0xf]
    %v207 = vld [vmem:[#allocation7 + $0xc] sm:$0xf]
    %v208 = vld [vmem:[#allocation7 + $0x10] sm:$0xf]
    %v209 = vld [vmem:[#allocation7 + $0x14] sm:$0xf]
    %v210 = vld [vmem:[#allocation7 + $0x18] sm:$0xf]
    %v211 = vld [vmem:[#allocation7 + $0x1c] sm:$0xf]
    %v212 = vld [vmem:[#allocation7 + $0x20] sm:$0xf]
    %v213 = vld [vmem:[#allocation7 + $0x24] sm:$0xf]
    %v214 = vld [vmem:[#allocation7 + $0x28] sm:$0xf]
    %v215 = vld [vmem:[#allocation7 + $0x2c] sm:$0xf]
    %v216 = vld [vmem:[#allocation7 + $0x30] sm:$0xf]
    %v217 = vld [vmem:[#allocation7 + $0x34] sm:$0xf]
    %v218 = vld [vmem:[#allocation7 + $0x38] sm:$0xf]
    %v219 = vld [vmem:[#allocation7 + $0x3c] sm:$0xf]
    %v220 = vld [vmem:[%s4] sm:$0x1]
    %v222 = vlaneseq
    %v223 = vshrl.u32 %v222, 7
    %v224 = vsub.s32 0, %v223
    %v225 = vrot.slane %v220, %v224
    %v243 = vunpack.c.l.b16 %v204
    %v244 = vunpack.c.l.b16 %v205
    %v245 = vunpack.c.l.b16 %v206
    %v246 = vunpack.c.l.b16 %v207
    %v247 = vunpack.c.l.b16 %v208
    %v248 = vunpack.c.l.b16 %v209
    %v249 = vunpack.c.l.b16 %v210
    %v250 = vunpack.c.l.b16 %v211
    %v251 = vunpack.c.l.b16 %v212
    %v252 = vunpack.c.l.b16 %v213
    %v253 = vunpack.c.l.b16 %v214
    %v254 = vunpack.c.l.b16 %v215
    %v255 = vunpack.c.l.b16 %v216
    %v256 = vunpack.c.l.b16 %v217
    %v257 = vunpack.c.l.b16 %v218
    %v258 = vunpack.c.l.b16 %v219
    %v259 = vpack.c.b16 %v244, %v243
    %v260 = vpack.c.b16 %v246, %v245
    %v261 = vpack.c.b16 %v248, %v247
    %v262 = vpack.c.b16 %v250, %v249
    %v263 = vpack.c.b16 %v252, %v251
    %v264 = vpack.c.b16 %v254, %v253
    %v265 = vpack.c.b16 %v256, %v255
    %v266 = vpack.c.b16 %v258, %v257
    %275 = vmatprep.subr.bf16.mxu0 0
    %276 = vmatpush1.bf16.msra.mxu0 %v259
    %277 = vmatprep.subr.bf16.mxu0 0
    %278 = vmatpush1.bf16.msra.mxu0 %v260
    %279 = vmatprep.subr.bf16.mxu0 0
    %280 = vmatpush1.bf16.msra.mxu0 %v261
    %281 = vmatprep.subr.bf16.mxu0 0
    %282 = vmatpush1.bf16.msra.mxu0 %v262
    %283 = vmatprep.subr.bf16.mxu0 0
    %284 = vmatpush1.bf16.msra.mxu0 %v263
    %285 = vmatprep.subr.bf16.mxu0 0
    %286 = vmatpush1.bf16.msra.mxu0 %v264
    %287 = vmatprep.subr.bf16.mxu0 0
    %288 = vmatpush1.bf16.msra.mxu0 %v265
    %289 = vmatprep.subr.bf16.mxu0 0
    %290 = vmatpush1.bf16.msra.mxu0 %v266
    %291 = vmatprep.subr.bf16.mxu0 0
    %292 = vmatpush1.bf16.msra.mxu0 0
    %293 = vmatprep.subr.bf16.mxu0 0
    %294 = vmatpush1.bf16.msra.mxu0 0
    %295 = vmatprep.subr.bf16.mxu0 0
    %296 = vmatpush1.bf16.msra.mxu0 0
    %297 = vmatprep.subr.bf16.mxu0 0
    %298 = vmatpush1.bf16.msra.mxu0 0
    %299 = vmatprep.subr.bf16.mxu0 0
    %300 = vmatpush1.bf16.msra.mxu0 0
    %301 = vmatprep.subr.bf16.mxu0 0
    %302 = vmatpush1.bf16.msra.mxu0 0
    %303 = vmatprep.subr.bf16.mxu0 0
    %304 = vmatpush1.bf16.msra.mxu0 0
    %305 = vmatprep.subr.bf16.mxu0 0
    %306 = vmatpush1.bf16.msra.mxu0 0
    %307 = vmatprep.mubr.bf16.mxu0 0
    %308 = vmatmul.mubr.bf16.gmra.mrb[0].mxu0 %v203
    %v309 = vpop.f32.mrb[0].mxu0
    %v310 = vadd.f32 %v225, %v309
    %v311 = vpop.f32.mrb[0].mxu0
    %v312 = vpop.f32.mrb[0].mxu0
    %v313 = vadd.f32 %v225, %v312
    %v314 = vpop.f32.mrb[0].mxu0
    %315 = vdwg.mxu0
    %v316 = vpack.c.bf16 %v313, %v310
    %v317 = vld [vmem:[#allocation8] sm:$0xf]
    %v318 = vld [vmem:[#allocation8 + $0x4] sm:$0xf]
    %v319 = vld [vmem:[#allocation8 + $0x8] sm:$0xf]
    %v320 = vld [vmem:[#allocation8 + $0xc] sm:$0xf]
    %v321 = vld [vmem:[#allocation8 + $0x10] sm:$0xf]
    %v322 = vld [vmem:[#allocation8 + $0x14] sm:$0xf]
    %v323 = vld [vmem:[#allocation8 + $0x18] sm:$0xf]
    %v324 = vld [vmem:[#allocation8 + $0x1c] sm:$0xf]
    %v325 = vld [vmem:[#allocation8 + $0x20] sm:$0xf]
    %v326 = vld [vmem:[#allocation8 + $0x24] sm:$0xf]
    %v327 = vld [vmem:[#allocation8 + $0x28] sm:$0xf]
    %v328 = vld [vmem:[#allocation8 + $0x2c] sm:$0xf]
    %v329 = vld [vmem:[#allocation8 + $0x30] sm:$0xf]
    %v330 = vld [vmem:[#allocation8 + $0x34] sm:$0xf]
    %v331 = vld [vmem:[#allocation8 + $0x38] sm:$0xf]
    %v332 = vld [vmem:[#allocation8 + $0x3c] sm:$0xf]
    %v333 = vld [vmem:[%s6] sm:$0x1]
    %v335 = vlaneseq
    %v336 = vshrl.u32 %v335, 7
    %v337 = vsub.s32 0, %v336
    %v338 = vrot.slane %v333, %v337
    %v356 = vunpack.c.l.b16 %v317
    %v357 = vunpack.c.l.b16 %v318
    %v358 = vunpack.c.l.b16 %v319
    %v359 = vunpack.c.l.b16 %v320
    %v360 = vunpack.c.l.b16 %v321
    %v361 = vunpack.c.l.b16 %v322
    %v362 = vunpack.c.l.b16 %v323
    %v363 = vunpack.c.l.b16 %v324
    %v364 = vunpack.c.l.b16 %v325
    %v365 = vunpack.c.l.b16 %v326
    %v366 = vunpack.c.l.b16 %v327
    %v367 = vunpack.c.l.b16 %v328
    %v368 = vunpack.c.l.b16 %v329
    %v369 = vunpack.c.l.b16 %v330
    %v370 = vunpack.c.l.b16 %v331
    %v371 = vunpack.c.l.b16 %v332
    %v372 = vpack.c.b16 %v357, %v356
    %v373 = vpack.c.b16 %v359, %v358
    %v374 = vpack.c.b16 %v361, %v360
    %v375 = vpack.c.b16 %v363, %v362
    %v376 = vpack.c.b16 %v365, %v364
    %v377 = vpack.c.b16 %v367, %v366
    %v378 = vpack.c.b16 %v369, %v368
    %v379 = vpack.c.b16 %v371, %v370
    %388 = vmatprep.subr.bf16.mxu0 0
    %389 = vmatpush1.bf16.msra.mxu0 %v372
    %390 = vmatprep.subr.bf16.mxu0 0
    %391 = vmatpush1.bf16.msra.mxu0 %v373
    %392 = vmatprep.subr.bf16.mxu0 0
    %393 = vmatpush1.bf16.msra.mxu0 %v374
    %394 = vmatprep.subr.bf16.mxu0 0
    %395 = vmatpush1.bf16.msra.mxu0 %v375
    %396 = vmatprep.subr.bf16.mxu0 0
    %397 = vmatpush1.bf16.msra.mxu0 %v376
    %398 = vmatprep.subr.bf16.mxu0 0
    %399 = vmatpush1.bf16.msra.mxu0 %v377
    %400 = vmatprep.subr.bf16.mxu0 0
    %401 = vmatpush1.bf16.msra.mxu0 %v378
    %402 = vmatprep.subr.bf16.mxu0 0
    %403 = vmatpush1.bf16.msra.mxu0 %v379
    %404 = vmatprep.subr.bf16.mxu0 0
    %405 = vmatpush1.bf16.msra.mxu0 0
    %406 = vmatprep.subr.bf16.mxu0 0
    %407 = vmatpush1.bf16.msra.mxu0 0
    %408 = vmatprep.subr.bf16.mxu0 0
    %409 = vmatpush1.bf16.msra.mxu0 0
    %410 = vmatprep.subr.bf16.mxu0 0
    %411 = vmatpush1.bf16.msra.mxu0 0
    %412 = vmatprep.subr.bf16.mxu0 0
    %413 = vmatpush1.bf16.msra.mxu0 0
    %414 = vmatprep.subr.bf16.mxu0 0
    %415 = vmatpush1.bf16.msra.mxu0 0
    %416 = vmatprep.subr.bf16.mxu0 0
    %417 = vmatpush1.bf16.msra.mxu0 0
    %418 = vmatprep.subr.bf16.mxu0 0
    %419 = vmatpush1.bf16.msra.mxu0 0
    %420 = vmatprep.mubr.bf16.mxu0 0
    %421 = vmatmul.mubr.bf16.gmra.mrb[0].mxu0 %v316
    %v422 = vpop.f32.mrb[0].mxu0
    %v423 = vadd.f32 %v338, %v422
    %v424 = vpop.f32.mrb[0].mxu0
    %v425 = vpop.f32.mrb[0].mxu0
    %v426 = vadd.f32 %v338, %v425
    %v427 = vpop.f32.mrb[0].mxu0
    %428 = vdwg.mxu0
    %429 = vst [vmem:[#allocation10] sm:$0xff] %v423
    %430 = vst [vmem:[#allocation10 + $0x8] sm:$0xff] %v426
    // Predicated region
    $region46: #{tpu_custom_call.1} parent=1 // pred_check
      _
    $region47: #{tpu_custom_call.1} parent=1 // pred_check_branch
      %432 = sbr.rel (0) target = $region49
    $region48: #{tpu_custom_call.1} parent=1 // pred_region
      %s434 = ssub.s32 256, 256
      %435 = vsyncadd [#allocation4], %s434
      %s436 = sshll.u32 [#allocation10], 4
      %s437 = int_to_ptr.vmem [resolvable:$true] %s436
      %442 = dma.vmem_to_hbm [thread:$0]  %s437, 256, %s7, [#allocation4], 128, 128, 8
    $region49: #{tpu_custom_call.1} parent=1 // pred_fallthru
      _
    // Predicated region
    $region50: #{tpu_custom_call.1} parent=1 // pred_check
      _
    $region51: #{tpu_custom_call.1} parent=1 // pred_check_branch
      %444 = sbr.rel (0) target = $region53
    $region52: #{tpu_custom_call.1} parent=1 // pred_region
      %445 = dma.done [#allocation4], 256
    $region53: #{tpu_custom_call.1} parent=1 // pred_fallthru
      _
    %446 = vsyncpa [#allocation3], 1
    %447 = vsyncpa [#allocation6], 1
    %448 = vsyncpa [#allocation9], 1
    %449 = vsyncpa [#allocation4], 1

</llo_original>
